<compile_context>
chip_gen: v5e
topology: v5e:2x2
jax: 0.10.0
libtpu: 0.0.40
codegen_flags: <defaults>
</compile_context>

<pallas_src>
import jax
import jax.numpy as jnp
from jax.experimental import pallas as pl
from jax.experimental.pallas import tpu as pltpu


def upsample_block_btc(x_btc, gamma, beta, weight_oik, *, t_tile_max=512):
    """Core op in (B, T, C) layout. Returns (B, 2T, C_out) float32."""
    B, T, C_in = x_btc.shape
    C_out = weight_oik.shape[0]

    # ---- tiling over time -------------------------------------------------
    T_TILE = T if T <= t_tile_max else t_tile_max
    n_t = -(-T // T_TILE)          # cdiv
    T_pad = n_t * T_TILE

    x_btc = x_btc.astype(jnp.float32)
    if T_pad != T:
        x_btc = jnp.pad(x_btc, ((0, 0), (0, T_pad - T), (0, 0)))

    # ---- 1-row halos per tile (values at global boundaries are masked
    #      inside the kernel, so zeros here are just placeholders) -----------
    zero_row = jnp.zeros((B, 1, C_in), jnp.float32)
    if n_t > 1:
        prev_rows = x_btc[:, T_TILE - 1: T_pad - 1: T_TILE, :]   # (B, n_t-1, C)
        next_rows = x_btc[:, T_TILE::T_TILE, :]                  # (B, n_t-1, C)
        prev_halo = jnp.concatenate([zero_row, prev_rows], axis=1)
        next_halo = jnp.concatenate([next_rows, zero_row], axis=1)
    else:
        prev_halo = zero_row
        next_halo = zero_row
    prev_halo = prev_halo[:, :, None, :]   # (B, n_t, 1, C_in)
    next_halo = next_halo[:, :, None, :]   # (B, n_t, 1, C_in)

    # ---- parity-combined conv weights (torch layout: (C_out, C_in, 3)) -----
    w = jnp.transpose(weight_oik, (2, 1, 0)).astype(jnp.float32)  # (3, C_in, C_out)
    w0, w1, w2 = w[0], w[1], w[2]
    # center matmul produces [even || odd] directly (lane-dense 2*C_out)
    w_center = jnp.concatenate([w1 + w2, w0 + w1], axis=1).astype(jnp.bfloat16)
    # side contributions: w0 with y[t-1] (even half), w2 with y[t+1] (odd half)
    w_side = jnp.stack([w0, w2], axis=0).astype(jnp.bfloat16)     # (2, C_in, C_out)

    g2 = gamma.reshape(1, C_in).astype(jnp.float32)
    b2 = beta.reshape(1, C_in).astype(jnp.float32)

    def kernel(x_ref, p_ref, n_ref, g_ref, bta_ref, wc_ref, ws_ref, o_ref):
        t_tile = x_ref.shape[1]

        # (T_TILE + 2, C_in): [prev-halo row, tile rows, next-halo row]
        x_ext = jnp.concatenate([p_ref[0, 0], x_ref[0], n_ref[0, 0]], axis=0)

        # LayerNorm over channels, f32 statistics, eps = 1e-5 (PyTorch default)
        mean = jnp.mean(x_ext, axis=-1, keepdims=True)
        centered = x_ext - mean
        var = jnp.mean(centered * centered, axis=-1, keepdims=True)
        xn = centered * jax.lax.rsqrt(var + 1e-5)
        xn = xn * g_ref[0][None, :] + bta_ref[0][None, :]

        # leaky_relu (negative_slope = 0.01)
        y = jnp.maximum(xn, 0.01 * xn)

        # zero rows whose global (pre-upsample) time index is outside [0, T):
        # enforces the conv's zero padding (y[-1] = y[T] = 0) and T-padding.
        g_idx = (pl.program_id(1) * t_tile - 1
                 + jax.lax.broadcasted_iota(jnp.int32, (t_tile + 2, 1), 0))
        valid = jnp.logical_and(g_idx >= 0, g_idx < T)
        y = jnp.where(valid, y, 0.0).astype(jnp.bfloat16)

        y_c = y[1:t_tile + 1]      # y[t]
        y_p = y[0:t_tile]          # y[t-1]
        y_n = y[2:t_tile + 2]      # y[t+1]

        center = jnp.dot(y_c, wc_ref[...], preferred_element_type=jnp.float32)
        even_x = jnp.dot(y_p, ws_ref[0], preferred_element_type=jnp.float32)
        odd_x = jnp.dot(y_n, ws_ref[1], preferred_element_type=jnp.float32)

        # lane-dense (T_TILE, 2*C_out) block: [even(t) || odd(t)] per row
        o_ref[0] = center + jnp.concatenate([even_x, odd_x], axis=1)

    out = pl.pallas_call(
        kernel,
        out_shape=jax.ShapeDtypeStruct((B, T_pad, 2 * C_out), jnp.float32),
        grid_spec=pltpu.PrefetchScalarGridSpec(
            num_scalar_prefetch=0,
            grid=(B, n_t),
            in_specs=[
                pl.BlockSpec((1, T_TILE, C_in), lambda b, t: (b, t, 0)),
                pl.BlockSpec((1, 1, 1, C_in), lambda b, t: (b, t, 0, 0)),
                pl.BlockSpec((1, 1, 1, C_in), lambda b, t: (b, t, 0, 0)),
                pl.BlockSpec((1, C_in), lambda b, t: (0, 0)),
                pl.BlockSpec((1, C_in), lambda b, t: (0, 0)),
                pl.BlockSpec((C_in, 2 * C_out), lambda b, t: (0, 0)),
                pl.BlockSpec((2, C_in, C_out), lambda b, t: (0, 0, 0)),
            ],
            out_specs=pl.BlockSpec((1, T_TILE, 2 * C_out), lambda b, t: (b, t, 0)),
        ),
        compiler_params=pltpu.CompilerParams(
            dimension_semantics=("parallel", "parallel"),
            vmem_limit_bytes=32 * 1024 * 1024,
        ),
    )(x_btc, prev_halo, next_halo, g2, b2, w_center, w_side)

    # (B, T_pad, [even||odd]) -> (B, 2*T_pad, C_out) -> trim any T padding.
    out = out.reshape(B, T_pad, 2, C_out).reshape(B, 2 * T_pad, C_out)
    return out[:, : 2 * T, :]


def upsample_block(x_nct, gamma, beta, weight_oik):
    """PyTorch-layout wrapper: x_nct (B, C_in, T) -> (B, C_out, 2T).

    NOTE: the NCT<->NTC transposes exist only to match the torch interface;
    if the surrounding model keeps (B, T, C) activations, call
    `upsample_block_btc` directly and skip both HBM transposes.
    """
    out_btc = upsample_block_btc(
        jnp.transpose(x_nct, (0, 2, 1)), gamma, beta, weight_oik
    )
    return jnp.transpose(out_btc, (0, 2, 1))


def _reference(x_nct, gamma, beta, weight_oik):
    """Pure-JAX f32 reference mirroring the PyTorch forward."""
    x = jnp.transpose(x_nct, (0, 2, 1))                       # (B, T, C)
    mean = jnp.mean(x, axis=-1, keepdims=True)
    var = jnp.mean((x - mean) ** 2, axis=-1, keepdims=True)
    x = (x - mean) / jnp.sqrt(var + 1e-5) * gamma + beta
    x = jnp.where(x >= 0, x, 0.01 * x)
    x = jnp.transpose(x, (0, 2, 1))                           # (B, C, T)
    x = jnp.repeat(x, 2, axis=-1)                             # nearest x2
    out = jax.lax.conv_general_dilated(
        x, weight_oik, window_strides=(1,), padding=((1, 1),),
        dimension_numbers=("NCH", "OIH", "NCH"),
    )
    return out


if __name__ == "__main__":
    B, C_IN, C_OUT, T = 2, 8, 16, 16

    key = jax.random.PRNGKey(0)
    kx, kw, kg, kb = jax.random.split(key, 4)

    x = jax.random.normal(kx, (B, C_IN, T), dtype=jnp.float32)
    conv_w = 0.1 * jax.random.normal(kw, (C_OUT, C_IN, 3), dtype=jnp.float32)
    ln_gamma = 1.0 + 0.05 * jax.random.normal(kg, (C_IN,), dtype=jnp.float32)
    ln_beta = 0.05 * jax.random.normal(kb, (C_IN,), dtype=jnp.float32)

    out = upsample_block(x, ln_gamma, ln_beta, conv_w)
    out = jax.block_until_ready(out)

    ref = _reference(x, ln_gamma, ln_beta, conv_w)
    assert out.shape == (B, C_OUT, 2 * T), out.shape
    # bf16 MXU operands -> looser tolerance than a pure-f32 kernel.
    assert jnp.allclose(out, ref, atol=5e-2, rtol=5e-2), \
        float(jnp.max(jnp.abs(out - ref)))

    print("KERNEL_OK")
</pallas_src>

<mosaic_0001>
module attributes {stable_mosaic.version = 11 : i64} {
  func.func @kernel(%arg0: i32, %arg1: i32, %arg2: memref<1x16x8xf32, #tpu.memory_space<vmem>>, %arg3: memref<1x1x1x8xf32, #tpu.memory_space<vmem>>, %arg4: memref<1x1x1x8xf32, #tpu.memory_space<vmem>>, %arg5: memref<1x8xf32, #tpu.memory_space<vmem>>, %arg6: memref<1x8xf32, #tpu.memory_space<vmem>>, %arg7: memref<8x32xbf16, #tpu.memory_space<vmem>>, %arg8: memref<2x8x16xbf16, #tpu.memory_space<vmem>>, %arg9: memref<1x16x32xf32, #tpu.memory_space<vmem>>) attributes {dimension_semantics = [#tpu.dimension_semantics<parallel>, #tpu.dimension_semantics<parallel>], iteration_bounds = array<i64: 2, 1>, scalar_prefetch = 0 : i64, scratch_operands = 0 : i64, tpu.core_type = #tpu.core_type<tc>, window_params = [{transform_indices = @transform_0, window_bounds = array<i64: 1, 16, 8>}, {transform_indices = @transform_1, window_bounds = array<i64: 1, 1, 1, 8>}, {transform_indices = @transform_2, window_bounds = array<i64: 1, 1, 1, 8>}, {pipeline_mode = #tpu.pipeline_mode<synchronous>, transform_indices = @transform_3, window_bounds = array<i64: 1, 8>}, {pipeline_mode = #tpu.pipeline_mode<synchronous>, transform_indices = @transform_4, window_bounds = array<i64: 1, 8>}, {pipeline_mode = #tpu.pipeline_mode<synchronous>, transform_indices = @transform_5, window_bounds = array<i64: 8, 32>}, {pipeline_mode = #tpu.pipeline_mode<synchronous>, transform_indices = @transform_6, window_bounds = array<i64: 2, 8, 16>}, {transform_indices = @transform_7, window_bounds = array<i64: 1, 16, 32>}]} {
    %c0 = arith.constant 0 : index
    %c0_0 = arith.constant 0 : index
    %c0_1 = arith.constant 0 : index
    %c0_2 = arith.constant 0 : index
    %0 = vector.load %arg3[%c0, %c0_0, %c0_1, %c0_2] : memref<1x1x1x8xf32, #tpu.memory_space<vmem>>, vector<1x1x1x8xf32>
    %1 = vector.shape_cast %0 : vector<1x1x1x8xf32> to vector<1x8xf32>
    %c0_3 = arith.constant 0 : index
    %c0_4 = arith.constant 0 : index
    %c0_5 = arith.constant 0 : index
    %2 = vector.load %arg2[%c0_3, %c0_4, %c0_5] : memref<1x16x8xf32, #tpu.memory_space<vmem>>, vector<1x16x8xf32>
    %3 = vector.shape_cast %2 : vector<1x16x8xf32> to vector<16x8xf32>
    %c0_6 = arith.constant 0 : index
    %c0_7 = arith.constant 0 : index
    %c0_8 = arith.constant 0 : index
    %c0_9 = arith.constant 0 : index
    %4 = vector.load %arg4[%c0_6, %c0_7, %c0_8, %c0_9] : memref<1x1x1x8xf32, #tpu.memory_space<vmem>>, vector<1x1x1x8xf32>
    %5 = vector.shape_cast %4 : vector<1x1x1x8xf32> to vector<1x8xf32>
    %6 = tpu.concatenate %1, %3, %5 in 0 : vector<1x8xf32>, vector<16x8xf32>, vector<1x8xf32> -> vector<18x8xf32>
    %cst = arith.constant dense<0.000000e+00> : vector<18xf32>
    %7 = vector.multi_reduction <add>, %6, %cst [1] : vector<18x8xf32> to vector<18xf32>
    %8 = vector.shape_cast %7 : vector<18xf32> to vector<18x1xf32>
    %cst_10 = arith.constant 8.000000e+00 : f32
    %9 = vector.broadcast %cst_10 : f32 to vector<18x1xf32>
    %10 = arith.divf %8, %9 : vector<18x1xf32>
    %11 = vector.broadcast %10 : vector<18x1xf32> to vector<18x8xf32>
    %12 = arith.subf %6, %11 : vector<18x8xf32>
    %13 = arith.mulf %12, %12 : vector<18x8xf32>
    %cst_11 = arith.constant dense<0.000000e+00> : vector<18xf32>
    %14 = vector.multi_reduction <add>, %13, %cst_11 [1] : vector<18x8xf32> to vector<18xf32>
    %15 = vector.shape_cast %14 : vector<18xf32> to vector<18x1xf32>
    %cst_12 = arith.constant 8.000000e+00 : f32
    %16 = vector.broadcast %cst_12 : f32 to vector<18x1xf32>
    %17 = arith.divf %15, %16 : vector<18x1xf32>
    %cst_13 = arith.constant 9.99999974E-6 : f32
    %18 = vector.broadcast %cst_13 : f32 to vector<18x1xf32>
    %19 = arith.addf %17, %18 : vector<18x1xf32>
    %20 = math.rsqrt %19 : vector<18x1xf32>
    %21 = vector.broadcast %20 : vector<18x1xf32> to vector<18x8xf32>
    %22 = arith.mulf %12, %21 : vector<18x8xf32>
    %c0_14 = arith.constant 0 : index
    %c0_15 = arith.constant 0 : index
    %23 = vector.load %arg5[%c0_14, %c0_15] : memref<1x8xf32, #tpu.memory_space<vmem>>, vector<1x8xf32>
    %24 = vector.shape_cast %23 : vector<1x8xf32> to vector<8xf32>
    %25 = vector.shape_cast %24 : vector<8xf32> to vector<1x8xf32>
    %26 = vector.broadcast %25 : vector<1x8xf32> to vector<18x8xf32>
    %27 = arith.mulf %22, %26 : vector<18x8xf32>
    %c0_16 = arith.constant 0 : index
    %c0_17 = arith.constant 0 : index
    %28 = vector.load %arg6[%c0_16, %c0_17] : memref<1x8xf32, #tpu.memory_space<vmem>>, vector<1x8xf32>
    %29 = vector.shape_cast %28 : vector<1x8xf32> to vector<8xf32>
    %30 = vector.shape_cast %29 : vector<8xf32> to vector<1x8xf32>
    %31 = vector.broadcast %30 : vector<1x8xf32> to vector<18x8xf32>
    %32 = arith.addf %27, %31 : vector<18x8xf32>
    %cst_18 = arith.constant 0.00999999977 : f32
    %33 = vector.broadcast %cst_18 : f32 to vector<18x8xf32>
    %34 = arith.mulf %33, %32 : vector<18x8xf32>
    %35 = arith.maximumf %32, %34 : vector<18x8xf32>
    %c16_i32 = arith.constant 16 : i32
    %36 = arith.muli %arg1, %c16_i32 : i32
    %c1_i32 = arith.constant 1 : i32
    %37 = arith.subi %36, %c1_i32 : i32
    %38 = tpu.iota {dimensions = array<i32: 0>} : vector<18x1xi32>
    %39 = vector.broadcast %37 : i32 to vector<18x1xi32>
    %40 = arith.addi %39, %38 : vector<18x1xi32>
    %c0_i32 = arith.constant 0 : i32
    %41 = vector.broadcast %c0_i32 : i32 to vector<18x1xi32>
    %42 = arith.cmpi sge, %40, %41 : vector<18x1xi32>
    %c16_i32_19 = arith.constant 16 : i32
    %43 = vector.broadcast %c16_i32_19 : i32 to vector<18x1xi32>
    %44 = arith.cmpi slt, %40, %43 : vector<18x1xi32>
    %45 = arith.andi %42, %44 : vector<18x1xi1>
    %cst_20 = arith.constant 0.000000e+00 : f32
    %46 = vector.shape_cast %45 : vector<18x1xi1> to vector<18x1xi1>
    %47 = vector.broadcast %46 : vector<18x1xi1> to vector<18x8xi1>
    %48 = vector.broadcast %cst_20 : f32 to vector<18x8xf32>
    %49 = arith.select %47, %35, %48 : vector<18x8xi1>, vector<18x8xf32>
    %50 = arith.truncf %49 : vector<18x8xf32> to vector<18x8xbf16>
    %51 = vector.extract_strided_slice %50 {offsets = [1, 0], sizes = [16, 8], strides = [1, 1]} : vector<18x8xbf16> to vector<16x8xbf16>
    %52 = vector.extract_strided_slice %50 {offsets = [0, 0], sizes = [16, 8], strides = [1, 1]} : vector<18x8xbf16> to vector<16x8xbf16>
    %53 = vector.extract_strided_slice %50 {offsets = [2, 0], sizes = [16, 8], strides = [1, 1]} : vector<18x8xbf16> to vector<16x8xbf16>
    %c0_21 = arith.constant 0 : index
    %c0_22 = arith.constant 0 : index
    %54 = vector.load %arg7[%c0_21, %c0_22] : memref<8x32xbf16, #tpu.memory_space<vmem>>, vector<8x32xbf16>
    %cst_23 = arith.constant dense<0.000000e+00> : vector<16x32xf32>
    %55 = tpu.matmul %51, %54, %cst_23 {dimension_numbers = #tpu.dot_dimension_numbers<[1], [0], [0], [1], [0, 0, 1, 1], [], []>} : vector<16x8xbf16>, vector<8x32xbf16>, vector<16x32xf32> -> vector<16x32xf32>
    %c0_24 = arith.constant 0 : index
    %c0_25 = arith.constant 0 : index
    %c0_26 = arith.constant 0 : index
    %56 = vector.load %arg8[%c0_24, %c0_25, %c0_26] : memref<2x8x16xbf16, #tpu.memory_space<vmem>>, vector<1x8x16xbf16>
    %57 = vector.shape_cast %56 : vector<1x8x16xbf16> to vector<8x16xbf16>
    %cst_27 = arith.constant dense<0.000000e+00> : vector<16x16xf32>
    %58 = tpu.matmul %52, %57, %cst_27 {dimension_numbers = #tpu.dot_dimension_numbers<[1], [0], [0], [1], [0, 0, 1, 1], [], []>} : vector<16x8xbf16>, vector<8x16xbf16>, vector<16x16xf32> -> vector<16x16xf32>
    %c1 = arith.constant 1 : index
    %c0_28 = arith.constant 0 : index
    %c0_29 = arith.constant 0 : index
    %59 = vector.load %arg8[%c1, %c0_28, %c0_29] : memref<2x8x16xbf16, #tpu.memory_space<vmem>>, vector<1x8x16xbf16>
    %60 = vector.shape_cast %59 : vector<1x8x16xbf16> to vector<8x16xbf16>
    %cst_30 = arith.constant dense<0.000000e+00> : vector<16x16xf32>
    %61 = tpu.matmul %53, %60, %cst_30 {dimension_numbers = #tpu.dot_dimension_numbers<[1], [0], [0], [1], [0, 0, 1, 1], [], []>} : vector<16x8xbf16>, vector<8x16xbf16>, vector<16x16xf32> -> vector<16x16xf32>
    %62 = tpu.concatenate %58, %61 in 1 : vector<16x16xf32>, vector<16x16xf32> -> vector<16x32xf32>
    %63 = arith.addf %55, %62 : vector<16x32xf32>
    %c0_31 = arith.constant 0 : index
    %c0_32 = arith.constant 0 : index
    %c0_33 = arith.constant 0 : index
    %64 = vector.load %arg9[%c0_31, %c0_32, %c0_33] : memref<1x16x32xf32, #tpu.memory_space<vmem>>, vector<1x16x32xf32>
    %65 = vector.shape_cast %64 : vector<1x16x32xf32> to vector<16x32xf32>
    %66 = vector.shape_cast %63 : vector<16x32xf32> to vector<1x16x32xf32>
    tpu.vector_store %arg9[%c0_31, %c0_32, %c0_33], %66 {strides = array<i32>} : memref<1x16x32xf32, #tpu.memory_space<vmem>>, vector<1x16x32xf32>,
    return
  }
  func.func @transform_0(%arg0: i32, %arg1: i32) -> (i32, i32, i32) {
    %c0_i32 = arith.constant 0 : i32
    %c0_i32_0 = arith.constant 0 : i32
    return %arg0, %arg1, %c0_i32 : i32, i32, i32
  }
  func.func @transform_1(%arg0: i32, %arg1: i32) -> (i32, i32, i32, i32) {
    %c0_i32 = arith.constant 0 : i32
    %c0_i32_0 = arith.constant 0 : i32
    %c0_i32_1 = arith.constant 0 : i32
    return %arg0, %arg1, %c0_i32, %c0_i32_0 : i32, i32, i32, i32
  }
  func.func @transform_2(%arg0: i32, %arg1: i32) -> (i32, i32, i32, i32) {
    %c0_i32 = arith.constant 0 : i32
    %c0_i32_0 = arith.constant 0 : i32
    %c0_i32_1 = arith.constant 0 : i32
    return %arg0, %arg1, %c0_i32, %c0_i32_0 : i32, i32, i32, i32
  }
  func.func @transform_3(%arg0: i32, %arg1: i32) -> (i32, i32) {
    %c0_i32 = arith.constant 0 : i32
    %c0_i32_0 = arith.constant 0 : i32
    %c0_i32_1 = arith.constant 0 : i32
    return %c0_i32, %c0_i32_0 : i32, i32
  }
  func.func @transform_4(%arg0: i32, %arg1: i32) -> (i32, i32) {
    %c0_i32 = arith.constant 0 : i32
    %c0_i32_0 = arith.constant 0 : i32
    %c0_i32_1 = arith.constant 0 : i32
    return %c0_i32, %c0_i32_0 : i32, i32
  }
  func.func @transform_5(%arg0: i32, %arg1: i32) -> (i32, i32) {
    %c0_i32 = arith.constant 0 : i32
    %c0_i32_0 = arith.constant 0 : i32
    %c0_i32_1 = arith.constant 0 : i32
    return %c0_i32, %c0_i32_0 : i32, i32
  }
  func.func @transform_6(%arg0: i32, %arg1: i32) -> (i32, i32, i32) {
    %c0_i32 = arith.constant 0 : i32
    %c0_i32_0 = arith.constant 0 : i32
    %c0_i32_1 = arith.constant 0 : i32
    %c0_i32_2 = arith.constant 0 : i32
    return %c0_i32, %c0_i32_0, %c0_i32_1 : i32, i32, i32
  }
  func.func @transform_7(%arg0: i32, %arg1: i32) -> (i32, i32, i32) {
    %c0_i32 = arith.constant 0 : i32
    %c0_i32_0 = arith.constant 0 : i32
    return %arg0, %arg1, %c0_i32 : i32, i32, i32
  }
}

</mosaic_0001>

<llo_original>
// kernel: tpu_custom_call.1
$region0: #{tpu_custom_call.1}
  #allocation0 [shape = 'u32[]', space=smem, size = 0x4, offset = 0x4, fixed_abs, tag = 'smem constant byte address 0x4 - core index']
  #allocation1 [shape = 'u32[72,128]{1,0:T(1,128)}', space=vmem, size = 0x9000, scoped, tag = 'internal scratch']
  %s0 = inlined_call_operand.vmem [shape: f32[2,16,8], index: 0, kind: input, shape index: {}]
  %s1 = inlined_call_operand.vmem [shape: f32[2,1,1,8], index: 1, kind: input, shape index: {}]
  %s2 = inlined_call_operand.vmem [shape: f32[2,1,1,8], index: 2, kind: input, shape index: {}]
  %s3 = inlined_call_operand.vmem [shape: f32[1,8], index: 3, kind: input, shape index: {}]
  %s4 = inlined_call_operand.vmem [shape: f32[1,8], index: 4, kind: input, shape index: {}]
  %s5 = inlined_call_operand.vmem [shape: bf16[8,32], index: 5, kind: input, shape index: {}]
  %s6 = inlined_call_operand.vmem [shape: bf16[2,8,16], index: 6, kind: input, shape index: {}]
  %s7 = inlined_call_operand.hbm [shape: f32[2,16,32], index: 7, kind: output, shape index: {}]
  %s8 = sld [smem:[#allocation0]]
  $region61: #{tpu_custom_call.1} parent=0
    _
  %s10 = ssub.s32 1, %s8
  %s11 = scalar_select 0, %s10, %s8
  $region1: #{tpu_custom_call.1} parent=0
    #allocation2 [shape = 'u8[16384]{0}', space=vmem, size = 0x4000, scoped, tag = 'output window, operand 0']
    #allocation3 [shape = 's32[2]{0}', space=sflag, size = 0x8, scoped, tag = 'scoped memory for tpu_custom_call.1']
    %12 = vsyncpa [#allocation3], 0
    %s13 = scalar_lea.sflag [#allocation3], 1
    %14 = vsyncpa %s13, 0
    loop: start=0, step=1, limit=4
    $region2: #{tpu_custom_call.1} parent=1 // loop_pre_header
      _
    $region3: #{tpu_custom_call.1} parent=1 // loop_header
      %s16 = sphi 0, %s20
      %p17 = scmp.ge.s32.totalorder %s16, 4
      %s23 = sphi 0, %s35
      %s24 = sphi 0, %s31
      %s25 = sphi 0, %s23
      %s26 = sphi 0, %s24
      %s27 = sphi 0, %s25
      %s28 = sphi 0, %s26
      %s40 = sphi 0, %s42
      %s43 = sphi 0, %s40
      %s44 = sphi 0, %s43
      %s60 = sphi 0, %s44
      %s68 = sphi 0, %s70
      %s71 = sphi 0, %s68
      %s72 = sphi 0, %s71
      %s88 = sphi 0, %s72
      %s96 = sphi 0, %s98
      %s99 = sphi 0, %s96
      %s100 = sphi 0, %s99
      %s116 = sphi 0, %s100
      %s120 = sphi 0, %s120
      %s122 = sphi 0, %s120
      %s123 = sphi 0, %s122
      %s137 = sphi 0, %s123
      %s141 = sphi 0, %s141
      %s143 = sphi 0, %s141
      %s144 = sphi 0, %s143
      %s158 = sphi 0, %s144
      %s162 = sphi 0, %s162
      %s164 = sphi 0, %s162
      %s165 = sphi 0, %s164
      %s179 = sphi 0, %s165
      %s183 = sphi 0, %s183
      %s185 = sphi 0, %s183
      %s186 = sphi 0, %s185
      %s200 = sphi 0, %s186
      %s208 = sphi 0, %s210
      %s211 = sphi 0, %s208
      %s212 = sphi 0, %s211
      %s228 = sphi 0, %s212
    $region4: #{tpu_custom_call.1} parent=1 // loop_header_branch
      %19 = sbr.rel (%p17) target = $region8
    $region5: #{tpu_custom_call.1} parent=1 // loop_body
      %s21 = ssub.s32 %s16, 1
      %s22 = ssub.s32 %s16, 2
      %s29 = sadd.s32 1, %s24
      %p30 = scmp.ge.s32.totalorder %s29, 1
      %s31 = scalar_select %p30, 0, %s29
      %s32 = sadd.s32 1, %s23
      %s33 = scalar_select %p30, %s32, %s23
      %p34 = scmp.ge.s32.totalorder %s33, 2
      %s35 = scalar_select %p34, 0, %s33
      %s36 = ssub.s32 %s23, %s35
      %s37 = ssub.s32 %s24, %s31
      %s38 = sor.u32 %s36, %s37
      %p39 = scmp.eq.s32.totalorder %s38, 0
      %s41 = sadd.s32 %s40, 1
      %s42 = scalar_select %p39, %s40, %s41
      %p45 = pneg %p39
      %p46 = scmp.eq.s32.totalorder %s16, 1
      %p47 = por %p45, %p46
      %p48 = scmp.ne.s32.totalorder %s40, %s43
      %p49 = scmp.eq.s32.totalorder %s16, 0
      %p50 = por %p48, %p49
      %p51 = scmp.ne.s32.totalorder %s40, %s43
      %p52 = scmp.eq.s32.totalorder %s21, 1
      %p53 = por %p51, %p52
      %p54 = scmp.ne.s32.totalorder %s43, %s44
      %p55 = scmp.eq.s32.totalorder %s21, 0
      %p56 = por %p54, %p55
      %p57 = scmp.ne.s32.totalorder %s43, %s44
      %p58 = scmp.eq.s32.totalorder %s22, 1
      %p59 = por %p57, %p58
      %p61 = scmp.ne.s32.totalorder %s44, %s60
      %p62 = scmp.eq.s32.totalorder %s22, 0
      %p63 = por %p61, %p62
      %s64 = ssub.s32 %s23, %s35
      %s65 = ssub.s32 %s24, %s31
      %s66 = sor.u32 %s64, %s65
      %p67 = scmp.eq.s32.totalorder %s66, 0
      %s69 = sadd.s32 %s68, 1
      %s70 = scalar_select %p67, %s68, %s69
      %p73 = pneg %p67
      %p74 = scmp.eq.s32.totalorder %s16, 1
      %p75 = por %p73, %p74
      %p76 = scmp.ne.s32.totalorder %s68, %s71
      %p77 = scmp.eq.s32.totalorder %s16, 0
      %p78 = por %p76, %p77
      %p79 = scmp.ne.s32.totalorder %s68, %s71
      %p80 = scmp.eq.s32.totalorder %s21, 1
      %p81 = por %p79, %p80
      %p82 = scmp.ne.s32.totalorder %s71, %s72
      %p83 = scmp.eq.s32.totalorder %s21, 0
      %p84 = por %p82, %p83
      %p85 = scmp.ne.s32.totalorder %s71, %s72
      %p86 = scmp.eq.s32.totalorder %s22, 1
      %p87 = por %p85, %p86
      %p89 = scmp.ne.s32.totalorder %s72, %s88
      %p90 = scmp.eq.s32.totalorder %s22, 0
      %p91 = por %p89, %p90
      %s92 = ssub.s32 %s23, %s35
      %s93 = ssub.s32 %s24, %s31
      %s94 = sor.u32 %s92, %s93
      %p95 = scmp.eq.s32.totalorder %s94, 0
      %s97 = sadd.s32 %s96, 1
      %s98 = scalar_select %p95, %s96, %s97
      %p101 = pneg %p95
      %p102 = scmp.eq.s32.totalorder %s16, 1
      %p103 = por %p101, %p102
      %p104 = scmp.ne.s32.totalorder %s96, %s99
      %p105 = scmp.eq.s32.totalorder %s16, 0
      %p106 = por %p104, %p105
      %p107 = scmp.ne.s32.totalorder %s96, %s99
      %p108 = scmp.eq.s32.totalorder %s21, 1
      %p109 = por %p107, %p108
      %p110 = scmp.ne.s32.totalorder %s99, %s100
      %p111 = scmp.eq.s32.totalorder %s21, 0
      %p112 = por %p110, %p111
      %p113 = scmp.ne.s32.totalorder %s99, %s100
      %p114 = scmp.eq.s32.totalorder %s22, 1
      %p115 = por %p113, %p114
      %p117 = scmp.ne.s32.totalorder %s100, %s116
      %p118 = scmp.eq.s32.totalorder %s22, 0
      %p119 = por %p117, %p118
      %s121 = sadd.s32 %s120, 1
      %p124 = scmp.eq.s32.totalorder %s16, 1
      %p125 = scmp.ne.s32.totalorder %s120, %s122
      %p126 = scmp.eq.s32.totalorder %s16, 0
      %p127 = por %p125, %p126
      %p128 = scmp.ne.s32.totalorder %s120, %s122
      %p129 = scmp.eq.s32.totalorder %s21, 1
      %p130 = por %p128, %p129
      %p131 = scmp.ne.s32.totalorder %s122, %s123
      %p132 = scmp.eq.s32.totalorder %s21, 0
      %p133 = por %p131, %p132
      %p134 = scmp.ne.s32.totalorder %s122, %s123
      %p135 = scmp.eq.s32.totalorder %s22, 1
      %p136 = por %p134, %p135
      %p138 = scmp.ne.s32.totalorder %s123, %s137
      %p139 = scmp.eq.s32.totalorder %s22, 0
      %p140 = por %p138, %p139
      %s142 = sadd.s32 %s141, 1
      %p145 = scmp.eq.s32.totalorder %s16, 1
      %p146 = scmp.ne.s32.totalorder %s141, %s143
      %p147 = scmp.eq.s32.totalorder %s16, 0
      %p148 = por %p146, %p147
      %p149 = scmp.ne.s32.totalorder %s141, %s143
      %p150 = scmp.eq.s32.totalorder %s21, 1
      %p151 = por %p149, %p150
      %p152 = scmp.ne.s32.totalorder %s143, %s144
      %p153 = scmp.eq.s32.totalorder %s21, 0
      %p154 = por %p152, %p153
      %p155 = scmp.ne.s32.totalorder %s143, %s144
      %p156 = scmp.eq.s32.totalorder %s22, 1
      %p157 = por %p155, %p156
      %p159 = scmp.ne.s32.totalorder %s144, %s158
      %p160 = scmp.eq.s32.totalorder %s22, 0
      %p161 = por %p159, %p160
      %s163 = sadd.s32 %s162, 1
      %p166 = scmp.eq.s32.totalorder %s16, 1
      %p167 = scmp.ne.s32.totalorder %s162, %s164
      %p168 = scmp.eq.s32.totalorder %s16, 0
      %p169 = por %p167, %p168
      %p170 = scmp.ne.s32.totalorder %s162, %s164
      %p171 = scmp.eq.s32.totalorder %s21, 1
      %p172 = por %p170, %p171
      %p173 = scmp.ne.s32.totalorder %s164, %s165
      %p174 = scmp.eq.s32.totalorder %s21, 0
      %p175 = por %p173, %p174
      %p176 = scmp.ne.s32.totalorder %s164, %s165
      %p177 = scmp.eq.s32.totalorder %s22, 1
      %p178 = por %p176, %p177
      %p180 = scmp.ne.s32.totalorder %s165, %s179
      %p181 = scmp.eq.s32.totalorder %s22, 0
      %p182 = por %p180, %p181
      %s184 = sadd.s32 %s183, 1
      %p187 = scmp.eq.s32.totalorder %s16, 1
      %p188 = scmp.ne.s32.totalorder %s183, %s185
      %p189 = scmp.eq.s32.totalorder %s16, 0
      %p190 = por %p188, %p189
      %p191 = scmp.ne.s32.totalorder %s183, %s185
      %p192 = scmp.eq.s32.totalorder %s21, 1
      %p193 = por %p191, %p192
      %p194 = scmp.ne.s32.totalorder %s185, %s186
      %p195 = scmp.eq.s32.totalorder %s21, 0
      %p196 = por %p194, %p195
      %p197 = scmp.ne.s32.totalorder %s185, %s186
      %p198 = scmp.eq.s32.totalorder %s22, 1
      %p199 = por %p197, %p198
      %p201 = scmp.ne.s32.totalorder %s186, %s200
      %p202 = scmp.eq.s32.totalorder %s22, 0
      %p203 = por %p201, %p202
      %s204 = ssub.s32 %s23, %s35
      %s205 = ssub.s32 %s24, %s31
      %s206 = sor.u32 %s204, %s205
      %p207 = scmp.eq.s32.totalorder %s206, 0
      %s209 = sadd.s32 %s208, 1
      %s210 = scalar_select %p207, %s208, %s209
      %p213 = pneg %p207
      %p214 = scmp.eq.s32.totalorder %s16, 1
      %p215 = por %p213, %p214
      %p216 = scmp.ne.s32.totalorder %s208, %s211
      %p217 = scmp.eq.s32.totalorder %s16, 0
      %p218 = por %p216, %p217
      %p219 = scmp.ne.s32.totalorder %s208, %s211
      %p220 = scmp.eq.s32.totalorder %s21, 1
      %p221 = por %p219, %p220
      %p222 = scmp.ne.s32.totalorder %s211, %s212
      %p223 = scmp.eq.s32.totalorder %s21, 0
      %p224 = por %p222, %p223
      %p225 = scmp.ne.s32.totalorder %s211, %s212
      %p226 = scmp.eq.s32.totalorder %s22, 1
      %p227 = por %p225, %p226
      %p229 = scmp.ne.s32.totalorder %s212, %s228
      %p230 = scmp.eq.s32.totalorder %s22, 0
      %p231 = por %p229, %p230
      %p232 = scmp.le.s32.totalorder 1, %s16
      %p233 = scmp.lt.s32.totalorder %s16, 3
      %p234 = pnand %p232, %p233
      %p235 = pneg %p234
      // Predicated region
      $region9: #{tpu_custom_call.1} parent=5 // pred_check
        _
      $region10: #{tpu_custom_call.1} parent=5 // pred_check_branch
        %237 = sbr.rel (%p234) target = $region12
      $region11: #{tpu_custom_call.1} parent=5 // pred_region
        %s238 = ssub.s32 %s16, 1
        // Predicated region
        $region13: #{tpu_custom_call.1} parent=11 // pred_check
          %p239 = pneg %p133
        $region14: #{tpu_custom_call.1} parent=11 // pred_check_branch
          %241 = sbr.rel (%p239) target = $region16
        $region15: #{tpu_custom_call.1} parent=11 // pred_region
          _
        $region16: #{tpu_custom_call.1} parent=11 // pred_fallthru
          _
        // Predicated region
        $region17: #{tpu_custom_call.1} parent=11 // pred_check
          %p242 = pneg %p154
        $region18: #{tpu_custom_call.1} parent=11 // pred_check_branch
          %244 = sbr.rel (%p242) target = $region20
        $region19: #{tpu_custom_call.1} parent=11 // pred_region
          _
        $region20: #{tpu_custom_call.1} parent=11 // pred_fallthru
          _
        // Predicated region
        $region21: #{tpu_custom_call.1} parent=11 // pred_check
          %p245 = pneg %p175
        $region22: #{tpu_custom_call.1} parent=11 // pred_check_branch
          %247 = sbr.rel (%p245) target = $region24
        $region23: #{tpu_custom_call.1} parent=11 // pred_region
          _
        $region24: #{tpu_custom_call.1} parent=11 // pred_fallthru
          _
        // Predicated region
        $region25: #{tpu_custom_call.1} parent=11 // pred_check
          %p248 = pneg %p196
        $region26: #{tpu_custom_call.1} parent=11 // pred_check_branch
          %250 = sbr.rel (%p248) target = $region28
        $region27: #{tpu_custom_call.1} parent=11 // pred_region
          _
        $region28: #{tpu_custom_call.1} parent=11 // pred_fallthru
          _
      $region12: #{tpu_custom_call.1} parent=5 // pred_fallthru
        _
      %p251 = scmp.lt.s32.totalorder %s16, 2
      // Predicated region
      $region29: #{tpu_custom_call.1} parent=5 // pred_check
        %p252 = pneg %p251
      $region30: #{tpu_custom_call.1} parent=5 // pred_check_branch
        %254 = sbr.rel (%p252) target = $region32
      $region31: #{tpu_custom_call.1} parent=5 // pred_region
        // Predicated region
        $region33: #{tpu_custom_call.1} parent=31 // pred_check
          %p255 = pneg %p50
        $region34: #{tpu_custom_call.1} parent=31 // pred_check_branch
          %257 = sbr.rel (%p255) target = $region36
        $region35: #{tpu_custom_call.1} parent=31 // pred_region
          %s258 = smul.u32 2, %s24
          %p259 = scmp.lt.s32.totalorder %s23, 1
          %s260 = scalar_select %p259, %s23, 1
          %p261 = scmp.lt.s32.totalorder %s258, 1
          %s262 = scalar_select %p261, %s258, 1
          %s263 = smul.addr %s260, 2
          %s264 = sadd.s32 %s262, %s263
          %s265 = smul.addr %s264, 8
          %s266 = scalar_lea.vmem %s0, %s265
          %s267 = smul.u32 2, %s24
        $region36: #{tpu_custom_call.1} parent=31 // pred_fallthru
          _
        // Predicated region
        $region37: #{tpu_custom_call.1} parent=31 // pred_check
          %p268 = pneg %p78
        $region38: #{tpu_custom_call.1} parent=31 // pred_check_branch
          %270 = sbr.rel (%p268) target = $region40
        $region39: #{tpu_custom_call.1} parent=31 // pred_region
          %p271 = scmp.lt.s32.totalorder %s23, 1
          %s272 = scalar_select %p271, %s23, 1
          %p273 = scmp.lt.s32.totalorder %s24, 0
          %s274 = scalar_select %p273, %s24, 0
          %s275 = sadd.s32 %s274, %s272
          %s276 = scalar_lea.vmem %s1, %s275
        $region40: #{tpu_custom_call.1} parent=31 // pred_fallthru
          _
        // Predicated region
        $region41: #{tpu_custom_call.1} parent=31 // pred_check
          %p277 = pneg %p106
        $region42: #{tpu_custom_call.1} parent=31 // pred_check_branch
          %279 = sbr.rel (%p277) target = $region44
        $region43: #{tpu_custom_call.1} parent=31 // pred_region
          %p280 = scmp.lt.s32.totalorder %s23, 1
          %s281 = scalar_select %p280, %s23, 1
          %p282 = scmp.lt.s32.totalorder %s24, 0
          %s283 = scalar_select %p282, %s24, 0
          %s284 = sadd.s32 %s283, %s281
          %s285 = scalar_lea.vmem %s2, %s284
        $region44: #{tpu_custom_call.1} parent=31 // pred_fallthru
          _
      $region32: #{tpu_custom_call.1} parent=5 // pred_fallthru
        _
      %p286 = scmp.le.s32.totalorder 1, %s16
      %p287 = scmp.lt.s32.totalorder %s16, 3
      %p288 = pnand %p286, %p287
      %p289 = pneg %p288
      // Predicated region
      $region45: #{tpu_custom_call.1} parent=5 // pred_check
        _
      $region46: #{tpu_custom_call.1} parent=5 // pred_check_branch
        %291 = sbr.rel (%p288) target = $region48
      $region47: #{tpu_custom_call.1} parent=5 // pred_region
        %s292 = ssub.s32 %s16, 1
        %s293 = smul.u32 2, %s26
        %p294 = scmp.lt.s32.totalorder %s25, 1
        %s295 = scalar_select %p294, %s25, 1
        %p296 = scmp.lt.s32.totalorder %s293, 1
        %s297 = scalar_select %p296, %s293, 1
        %s298 = smul.addr %s295, 2
        %s299 = sadd.s32 %s297, %s298
        %s300 = smul.addr %s299, 8
        %s301 = scalar_lea.vmem %s0, %s300
        %p302 = pneg %p56
        %p303 = pneg %p53
        %p304 = scmp.lt.s32.totalorder %s25, 1
        %s305 = scalar_select %p304, %s25, 1
        %p306 = scmp.lt.s32.totalorder %s26, 0
        %s307 = scalar_select %p306, %s26, 0
        %s308 = sadd.s32 %s307, %s305
        %s309 = scalar_lea.vmem %s1, %s308
        %p310 = pneg %p84
        %p311 = pneg %p81
        %p312 = scmp.lt.s32.totalorder %s25, 1
        %s313 = scalar_select %p312, %s25, 1
        %p314 = scmp.lt.s32.totalorder %s26, 0
        %s315 = scalar_select %p314, %s26, 0
        %s316 = sadd.s32 %s315, %s313
        %s317 = scalar_lea.vmem %s2, %s316
        %p318 = pneg %p112
        %p319 = pneg %p109
        %p320 = pneg %p133
        %p321 = pneg %p130
        %p322 = pneg %p154
        %p323 = pneg %p151
        %p324 = pneg %p175
        %p325 = pneg %p172
        %p326 = pneg %p196
        %p327 = pneg %p193
        %p328 = pneg %p224
        %p329 = pneg %p221
        %s330 = sand.u32 %s211, 1
        %s331 = scalar_lea.sflag [#allocation3], %s330
        %s332 = sand.u32 %s211, 1
        %s333 = smul.addr %s332, 16
        %s334 = scalar_lea.vmem [#allocation2], %s333
        %s335 = smul.u32 2, %s26
        %p336 = scmp.lt.s32.totalorder %s25, 1
        %s337 = scalar_select %p336, %s25, 1
        %p338 = scmp.lt.s32.totalorder %s335, 1
        %s339 = scalar_select %p338, %s335, 1
        %s340 = smul.addr %s337, 2
        %s341 = sadd.s32 %s339, %s340
        %s342 = smul.addr %s341, 8
        %s343 = scalar_lea.vmem %s0, %s342
        %s344 = smul.u32 2, %s26
        %p345 = scmp.lt.s32.totalorder %s25, 1
        %s346 = scalar_select %p345, %s25, 1
        %p347 = scmp.lt.s32.totalorder %s26, 0
        %s348 = scalar_select %p347, %s26, 0
        %s349 = sadd.s32 %s348, %s346
        %s350 = scalar_lea.vmem %s1, %s349
        %p351 = scmp.lt.s32.totalorder %s25, 1
        %s352 = scalar_select %p351, %s25, 1
        %p353 = scmp.lt.s32.totalorder %s26, 0
        %s354 = scalar_select %p353, %s26, 0
        %s355 = sadd.s32 %s354, %s352
        %s356 = scalar_lea.vmem %s2, %s355
        %s357 = smul.u32 2, %s26
        %v359 = vld [vmem:[%s350] sm:$0x1]
        %v360 = vld [vmem:[%s343] sm:$0xff]
        %v361 = vld [vmem:[%s343 + $0x8] sm:$0xff]
        %v362 = vld [vmem:[%s356] sm:$0x1]
        %vm365 = vcmask 1040384
        %v366 = vrot.slane %v360, 7
        %v367 = vrot.slane %v361, 7
        %v368 = vsel %vm365, %v366, %v367
        %v373 = vperm.slane %v362, 0
        %v375 = vsel %vm365, %v359, %v366
        %v376 = vsel %vm365, %v367, %v373
        %vm377 = vcmask 64512
        %v378 = vsel %vm377, %v375, 0.0
        %379 = vadd.xlane.f32.xlu0 %v378
        %v380 = vpop.xlane.xlu0 %379
        %v381 = vsel %vm377, %v368, 0.0
        %382 = vadd.xlane.f32.xlu0 %v381
        %v383 = vpop.xlane.xlu0 %382
        %vm384 = vcmask 58368
        %v385 = vsel %vm384, %v376, 0.0
        %386 = vadd.xlane.f32.xlu0 %v385
        %v387 = vpop.xlane.xlu0 %386
        %v388 = vrcp.pop 8.0
        %v389 = vmul.f32 8.0, %v388
        %v390 = vsub.f32 1.0, %v389
        %v391 = vmul.f32 %v388, %v390
        %v392 = vadd.f32 %v388, %v391
        %vm393 = vweird.f32 %v388
        %v394 = vsel %vm393, %v388, %v392
        %v395 = vmul.f32 %v380, %v394
        %v396 = vmul.f32 %v383, %v394
        %v397 = vmul.f32 %v387, %v394
        %v398 = vsub.f32 %v375, %v395
        %v399 = vsub.f32 %v368, %v396
        %v400 = vsub.f32 %v376, %v397
        %v401 = vmul.f32 %v398, %v398
        %v402 = vmul.f32 %v399, %v399
        %v403 = vmul.f32 %v400, %v400
        %v404 = vsel %vm377, %v401, 0.0
        %405 = vadd.xlane.f32.xlu0 %v404
        %v406 = vpop.xlane.xlu0 %405
        %v407 = vsel %vm377, %v402, 0.0
        %408 = vadd.xlane.f32.xlu0 %v407
        %v409 = vpop.xlane.xlu0 %408
        %v410 = vsel %vm384, %v403, 0.0
        %411 = vadd.xlane.f32.xlu0 %v410
        %v412 = vpop.xlane.xlu0 %411
        %v413 = vmul.f32 %v406, %v394
        %v414 = vmul.f32 %v409, %v394
        %v415 = vmul.f32 %v412, %v394
        %v416 = vadd.f32 %v413, 1e-05
        %v417 = vadd.f32 %v414, 1e-05
        %v418 = vadd.f32 %v415, 1e-05
        %v419 = vrsqrt.pop %v416
        %v420 = vmul.f32 %v419, %v416
        %v421 = vmul.f32 %v420, %v419
        %v422 = vmul.f32 0.5, %v421
        %v423 = vsub.f32 1.5, %v422
        %v424 = vmul.f32 %v419, %v423
        %vm425 = vweird.f32 %v416
        %vm426 = vweird.f32 %v419
        %vm427 = vmor %vm425, %vm426
        %v428 = vsel %vm427, %v419, %v424
        %v429 = vrsqrt.pop %v417
        %v430 = vmul.f32 %v429, %v417
        %v431 = vmul.f32 %v430, %v429
        %v432 = vmul.f32 0.5, %v431
        %v433 = vsub.f32 1.5, %v432
        %v434 = vmul.f32 %v429, %v433
        %vm435 = vweird.f32 %v417
        %vm436 = vweird.f32 %v429
        %vm437 = vmor %vm435, %vm436
        %v438 = vsel %vm437, %v429, %v434
        %v439 = vrsqrt.pop %v418
        %v440 = vmul.f32 %v439, %v418
        %v441 = vmul.f32 %v440, %v439
        %v442 = vmul.f32 0.5, %v441
        %v443 = vsub.f32 1.5, %v442
        %v444 = vmul.f32 %v439, %v443
        %vm445 = vweird.f32 %v418
        %vm446 = vweird.f32 %v439
        %vm447 = vmor %vm445, %vm446
        %v448 = vsel %vm447, %v439, %v444
        %v449 = vmul.f32 %v398, %v428
        %v450 = vmul.f32 %v399, %v438
        %v451 = vmul.f32 %v400, %v448
        %v452 = vld [vmem:[%s3] sm:$0x1]
        %v454 = vperm.slane %v452, 0
        %v456 = vmul.f32 %v449, %v454
        %v457 = vmul.f32 %v450, %v454
        %v458 = vmul.f32 %v451, %v454
        %v459 = vld [vmem:[%s4] sm:$0x1]
        %v461 = vperm.slane %v459, 0
        %v463 = vadd.f32 %v456, %v461
        %v464 = vadd.f32 %v457, %v461
        %v465 = vadd.f32 %v458, %v461
        %v466 = vmul.f32 %v463, 0.01
        %v467 = vmul.f32 %v464, 0.01
        %v468 = vmul.f32 %v465, 0.01
        %v469 = vmax.f32 %v463, %v466
        %v470 = vmax.f32 %v464, %v467
        %v471 = vmax.f32 %v465, %v468
        %s472 = smul.u32 %s26, 16
        %s473 = ssub.s32 %s472, 1
        %v474 = vlaneseq
        %v475 = vshrl.u32 %v474, 7
        %v476 = vadd.s32 %v475, 8
        %v477 = vadd.s32 %v475, 16
        %v478 = vstv %s473
        %v479 = vadd.s32 %v478, %v475
        %v480 = vadd.s32 %v478, %v476
        %v481 = vadd.s32 %v478, %v477
        %vm482 = vcmp.ge.s32.totalorder %v479, 0
        %vm483 = vcmp.ge.s32.totalorder %v480, 0
        %vm484 = vcmp.ge.s32.totalorder %v481, 0
        %vm485 = vcmp.lt.s32.totalorder %v479, 16
        %vm486 = vcmp.lt.s32.totalorder %v480, 16
        %vm487 = vcmp.lt.s32.totalorder %v481, 16
        %vm488 = vmand %vm482, %vm485
        %vm489 = vmand %vm483, %vm486
        %vm490 = vmand %vm484, %vm487
        %v491 = vsel %vm488, 1, 0
        %v492 = vsel %vm489, 1, 0
        %v493 = vsel %vm490, 1, 0
        %vm494 = vcmp.eq.s32.totalorder %v491, 1
        %vm495 = vcmp.eq.s32.totalorder %v492, 1
        %vm496 = vcmp.eq.s32.totalorder %v493, 1
        %v497 = vsel %vm494, %v469, 0.0
        %v498 = vsel %vm495, %v470, 0.0
        %v499 = vsel %vm496, %v471, 0.0
        %v500 = vpack.c.bf16 %v497, %v497
        %v501 = vpack.c.bf16 %v498, %v498
        %v502 = vpack.c.bf16 %v499, %v499
        %v503 = vld [vmem:[%s5] sm:$0xf]
        %v504 = vld [vmem:[%s6] sm:$0xf]
        %v507 = vunpack.c.l.b16 %v500
        %v508 = vunpack.c.l.b16 %v501
        %v509 = vpack.c.b16 %v508, %v507
        %v511 = vsel %vm377, %v509, 0
        %vm513 = vcmask 1043456
        %v515 = vsel %vm513, %v504, 0
        %517 = vmatpush.bf16.msra.mxu0 0
        %518 = vmatpush.bf16.msra.mxu0 0
        %519 = vmatpush.bf16.msra.mxu0 0
        %520 = vmatpush.bf16.msra.mxu0 0
        %521 = vmatpush.bf16.msra.mxu0 0
        %522 = vmatpush.bf16.msra.mxu0 0
        %523 = vmatpush.bf16.msra.mxu0 0
        %524 = vmatpush.bf16.msra.mxu0 %v515
        %525 = vmatmul.bf16.gmra.mxu0 %v511
        %v526 = vpop.f32.mrf.mxu0
        %v527 = vadd.f32 0.0, %v526
        %v528 = vpop.f32.mrf.mxu0
        %v529 = vadd.f32 0.0, %v528
        %530 = vdwg.mxu0
        %s531 = scalar_lea.vmem %s6, 4
        %v532 = vld [vmem:[%s531] sm:$0xf]
        %v534 = vunpack.c.l.b16 %v502
        %v535 = vpack.c.b16 %v534, %v534
        %vm536 = vcmask 1046528
        %v537 = vrot.slane %v509, 1
        %v538 = vrot.slane %v535, 1
        %v539 = vsel %vm536, %v537, %v538
        %v541 = vsel %vm377, %v539, 0
        %v544 = vsel %vm513, %v532, 0
        %546 = vmatpush.bf16.msra.mxu0 0
        %547 = vmatpush.bf16.msra.mxu0 0
        %548 = vmatpush.bf16.msra.mxu0 0
        %549 = vmatpush.bf16.msra.mxu0 0
        %550 = vmatpush.bf16.msra.mxu0 0
        %551 = vmatpush.bf16.msra.mxu0 0
        %552 = vmatpush.bf16.msra.mxu0 0
        %553 = vmatpush.bf16.msra.mxu0 %v544
        %554 = vmatmul.bf16.gmra.mxu0 %v541
        %v555 = vpop.f32.mrf.mxu0
        %v556 = vadd.f32 0.0, %v555
        %v557 = vpop.f32.mrf.mxu0
        %v558 = vadd.f32 0.0, %v557
        %559 = vdwg.mxu0
        %562 = vrot.lane.b32.xlu0 %v556, 16
        %v563 = vpop.permute.xlu0 %562
        %564 = vrot.lane.b32.xlu0 %v558, 16
        %v565 = vpop.permute.xlu0 %564
        %vm568 = vcmask 130048
        %v569 = vsel %vm568, %v527, %v563
        %v570 = vsel %vm568, %v529, %v565
        %vm571 = vsmask.f32 7424
        %v572 = vshrl.u32 %v509, 16
        %v574 = vshll.u32 %v509, 16
        %v576 = vrot.slane %v574, 1
        %v577 = vor.u32 %v572, %v576
        %v579 = vshll.u32 %v535, 16
        %v581 = vrot.slane %v579, 1
        %v582 = vsel %vm571, %v577, %v581
        %v584 = vsel %vm377, %v582, 0
        %v587 = vsel %vm513, %v503, 0
        %589 = vmatpush.bf16.msra.mxu0 0
        %590 = vmatpush.bf16.msra.mxu0 0
        %591 = vmatpush.bf16.msra.mxu0 0
        %592 = vmatpush.bf16.msra.mxu0 0
        %593 = vmatpush.bf16.msra.mxu0 0
        %594 = vmatpush.bf16.msra.mxu0 0
        %595 = vmatpush.bf16.msra.mxu0 0
        %596 = vmatpush.bf16.msra.mxu0 %v587
        %597 = vmatmul.bf16.gmra.mxu0 %v584
        %v598 = vpop.f32.mrf.mxu0
        %v599 = vadd.f32 %v569, %v598
        %v600 = vpop.f32.mrf.mxu0
        %v601 = vadd.f32 %v570, %v600
        %602 = vdwg.mxu0
        %vm603 = vcmask 261120
        %604 = vst.msk [vmem:[%s334] sm:$0xff] %vm603, %v599
        %605 = vst.msk [vmem:[%s334 + $0x8] sm:$0xff] %vm603, %v601
        %s606 = sand.u32 %s211, 1
        %s607 = scalar_lea.sflag [#allocation3], %s606
        %s608 = sand.u32 %s211, 1
        %s609 = smul.addr %s608, 16
        %s610 = scalar_lea.vmem [#allocation2], %s609
        // Predicated region
        $region49: #{tpu_custom_call.1} parent=47 // pred_check
          %p611 = pneg %p221
        $region50: #{tpu_custom_call.1} parent=47 // pred_check_branch
          %613 = sbr.rel (%p611) target = $region52
        $region51: #{tpu_custom_call.1} parent=47 // pred_region
          %s614 = smul.u32 2, %s26
          %616 = vsyncadd %s607, 0
          %s617 = smul.addr %s25, 2
          %s618 = sadd.s32 %s614, %s617
          %s619 = smul.addr %s618, 8
          %s620 = scalar_lea.hbm %s7, %s619
          %s621 = sshll.u32 %s610, 4
          %s622 = int_to_ptr.vmem [resolvable:$true] %s621
          %s623 = sshll.u32 %s620, 4
          %s624 = int_to_ptr.hbm [resolvable:$true] %s623
          %629 = dma.vmem_to_hbm [thread:$0]  %s622, 256, %s624, %s607, 128, 128, 8
        $region52: #{tpu_custom_call.1} parent=47 // pred_fallthru
          _
      $region48: #{tpu_custom_call.1} parent=5 // pred_fallthru
        _
      %p630 = scmp.le.s32.totalorder 2, %s16
      // Predicated region
      $region53: #{tpu_custom_call.1} parent=5 // pred_check
        %p631 = pneg %p630
      $region54: #{tpu_custom_call.1} parent=5 // pred_check_branch
        %633 = sbr.rel (%p631) target = $region56
      $region55: #{tpu_custom_call.1} parent=5 // pred_region
        %s634 = ssub.s32 %s16, 2
        // Predicated region
        $region57: #{tpu_custom_call.1} parent=55 // pred_check
          %p635 = pneg %p227
        $region58: #{tpu_custom_call.1} parent=55 // pred_check_branch
          %637 = sbr.rel (%p635) target = $region60
        $region59: #{tpu_custom_call.1} parent=55 // pred_region
          %s638 = sand.u32 %s212, 1
          %s639 = scalar_lea.sflag [#allocation3], %s638
          %s640 = sand.u32 %s212, 1
          %s641 = smul.addr %s640, 16
          %s642 = scalar_lea.vmem [#allocation2], %s641
          %644 = dma.done %s639, 256
        $region60: #{tpu_custom_call.1} parent=55 // pred_fallthru
          _
      $region56: #{tpu_custom_call.1} parent=5 // pred_fallthru
        _
    $region6: #{tpu_custom_call.1} parent=1 // loop_footer
      %s20 = sadd.s32 1, %s16
    $region7: #{tpu_custom_call.1} parent=1 // loop_footer_branch
      %15 = sbr.rel target = $region3
    $region8: #{tpu_custom_call.1} parent=1 // loop_exit
      _
    %645 = vsyncpa [#allocation3], 1
    %s646 = scalar_lea.sflag [#allocation3], 1
    %647 = vsyncpa %s646, 1

</llo_original>
